<compile_context>
chip_gen: v5e
topology: v5e:2x2
jax: 0.10.0
libtpu: 0.0.40
codegen_flags: <defaults>
</compile_context>

<pallas_src>
import jax
import jax.numpy as jnp
import numpy as np
from jax.experimental import pallas as pl
from jax.experimental.pallas import tpu as pltpu

EPS = 1e-5


def _encoder_block_kernel(x_ref, w1_ref, w2_ref, g1_ref, be1_ref,
                          g2_ref, be2_ref, gsum_ref, gbc_ref, o_ref):
    """Whole encoder block in one invocation (toy shapes; everything in VMEM).

    x_ref    : ((H+2)*N, Cin*W)    H-halo-padded input slab, rows = h*N+n, lanes = c*W+w
    w1_ref   : (3, Cin*W,  Cout*W) banded conv1 weights (one block-Toeplitz per kh tap)
    w2_ref   : (3, Cout*W, Cout*W) banded conv2 weights
    g*/be*   : (1, Cout)           BN gamma / beta
    gsum_ref : (Cout*W, Cout)      0/1 lane -> channel group-sum matrix
    gbc_ref  : (Cout, Cout*W)      its transpose (channel -> lane broadcast)
    o_ref    : (H*N, Cout*W)       output slab (fully lane-dense: Cout*W = 128 here)
    """
    HN, CW = o_ref.shape
    NB = (x_ref.shape[0] - HN) // 2          # batch size == halo rows per side
    Cout = gsum_ref.shape[1]
    cnt = float(HN * (CW // Cout))           # N*H*W elements per channel

    gsum = gsum_ref[...]
    gbc = gbc_ref[...]

    def conv3x3(src, w_ref):
        # src: ((H+2)*N, K) H-halo-padded slab.  3 matmuls, one per kh tap;
        # kw taps + W zero-padding live inside the banded weight matrices.
        acc = jnp.dot(src[0:HN, :], w_ref[0],
                      preferred_element_type=jnp.float32)
        acc = acc + jnp.dot(src[NB:NB + HN, :], w_ref[1],
                            preferred_element_type=jnp.float32)
        acc = acc + jnp.dot(src[2 * NB:2 * NB + HN, :], w_ref[2],
                            preferred_element_type=jnp.float32)
        return acc

    def bn_relu(acc, g_ref, be_ref):
        # Training-mode BN with batch statistics (biased variance), one pass.
        rs = jnp.sum(acc, axis=0, keepdims=True)               # (1, CW)
        rss = jnp.sum(acc * acc, axis=0, keepdims=True)        # (1, CW)
        mean = jnp.dot(rs, gsum, preferred_element_type=jnp.float32) / cnt   # (1, Cout)
        ex2 = jnp.dot(rss, gsum, preferred_element_type=jnp.float32) / cnt
        inv = jax.lax.rsqrt(ex2 - mean * mean + EPS)
        scale = inv * g_ref[...]                               # (1, Cout)
        shift = be_ref[...] - mean * scale                     # (1, Cout)
        scale_l = jnp.dot(scale, gbc, preferred_element_type=jnp.float32)     # (1, CW)
        shift_l = jnp.dot(shift, gbc, preferred_element_type=jnp.float32)     # (1, CW)
        return jnp.maximum(acc * scale_l + shift_l, 0.0)

    x = x_ref[...]                                             # ((H+2)*N, Cin*W)
    h1 = bn_relu(conv3x3(x, w1_ref), g1_ref, be1_ref)          # (H*N, CW)

    # H-halo for conv2: 2*N zero rows; W padding is already in the band weights.
    halo = jnp.zeros((NB, CW), jnp.float32)
    h1p = jnp.concatenate([halo, h1, halo], axis=0)            # ((H+2)*N, CW)

    o_ref[...] = bn_relu(conv3x3(h1p, w2_ref), g2_ref, be2_ref)


def _banded_weights(wt, cin, W):
    """(Cout, cin, 3, 3) PyTorch conv weight -> (3, cin*W, Cout*W) banded matrices.

    B[kh][ci*W + wi, co*W + wo] = wt[co, ci, kh, wi - wo + 1]  (0 outside the band),
    i.e. a stride-1, zero-padded 3-tap correlation along W baked into the matmul.
    """
    Cout = wt.shape[0]
    shifts = jnp.stack([jnp.eye(W, W, k=1 - kw, dtype=wt.dtype) for kw in range(3)])
    band = jnp.einsum('ochk,kwv->hcwov', wt, shifts)           # (3, cin, W, Cout, W)
    return band.reshape(3, cin * W, Cout * W)


def encoder_block_forward(x_nchw, params):
    """NCHW in, NCHW out (PyTorch conventions)."""
    w1, b1, g1, be1, w2, b2, g2, be2 = params
    del b1, b2  # conv bias is cancelled exactly by training-mode BN mean subtraction
    N, Cin, H, W = x_nchw.shape
    Cout = w1.shape[0]
    CW = Cout * W

    # Input slab: rows = h*N + n, lanes = ci*W + w, plus N zero halo rows per side.
    xs = jnp.transpose(x_nchw, (2, 0, 1, 3)).reshape(H * N, Cin * W)
    xs = jnp.pad(xs, ((N, N), (0, 0)))

    b1m = _banded_weights(w1, Cin, W)        # (3, Cin*W,  Cout*W)
    b2m = _banded_weights(w2, Cout, W)       # (3, Cout*W, Cout*W)

    # 0/1 lane<->channel matrices for the in-kernel per-channel BN reduction.
    lane_chan = jnp.arange(CW) // W
    gsum = (lane_chan[:, None] == jnp.arange(Cout)[None, :]).astype(jnp.float32)
    gbc = jnp.transpose(gsum)

    vmem = pl.BlockSpec(memory_space=pltpu.MemorySpace.VMEM)
    out2d = pl.pallas_call(
        _encoder_block_kernel,
        out_shape=jax.ShapeDtypeStruct((H * N, CW), jnp.float32),
        in_specs=[vmem] * 9,
        out_specs=vmem,
    )(xs, b1m, b2m,
      g1.reshape(1, Cout), be1.reshape(1, Cout),
      g2.reshape(1, Cout), be2.reshape(1, Cout),
      gsum, gbc)

    # (H*N, Cout*W) -> (N, Cout, H, W)
    return out2d.reshape(H, N, Cout, W).transpose(1, 2, 0, 3)


def _reference_forward(x_nchw, params):
    """Pure-JAX reference (training-mode BN, biased variance, with conv bias)."""
    w1, b1, g1, be1, w2, b2, g2, be2 = params

    def conv_bn_relu(x, w, b, g, be):
        y = jax.lax.conv_general_dilated(
            x, w, window_strides=(1, 1), padding=((1, 1), (1, 1)),
            dimension_numbers=('NCHW', 'OIHW', 'NCHW'))
        y = y + b[None, :, None, None]
        mean = jnp.mean(y, axis=(0, 2, 3), keepdims=True)
        var = jnp.mean((y - mean) ** 2, axis=(0, 2, 3), keepdims=True)
        y = (y - mean) * jax.lax.rsqrt(var + EPS)
        y = y * g[None, :, None, None] + be[None, :, None, None]
        return jnp.maximum(y, 0.0)

    x = conv_bn_relu(x_nchw, w1, b1, g1, be1)
    return conv_bn_relu(x, w2, b2, g2, be2)


if __name__ == "__main__":
    # encoder_block(in_ch=4, out_ch=8) on a (2, 4, 16, 16) input.
    N, in_ch, out_ch, H, W = 2, 4, 8, 16, 16

    key = jax.random.PRNGKey(0)
    ks = jax.random.split(key, 9)

    x = jax.random.normal(ks[0], (N, in_ch, H, W), dtype=jnp.float32)

    w1 = 0.2 * jax.random.normal(ks[1], (out_ch, in_ch, 3, 3), dtype=jnp.float32)
    b1 = 0.1 * jax.random.normal(ks[2], (out_ch,), dtype=jnp.float32)
    g1 = 1.0 + 0.1 * jax.random.normal(ks[3], (out_ch,), dtype=jnp.float32)
    be1 = 0.1 * jax.random.normal(ks[4], (out_ch,), dtype=jnp.float32)

    w2 = 0.2 * jax.random.normal(ks[5], (out_ch, out_ch, 3, 3), dtype=jnp.float32)
    b2 = 0.1 * jax.random.normal(ks[6], (out_ch,), dtype=jnp.float32)
    g2 = 1.0 + 0.1 * jax.random.normal(ks[7], (out_ch,), dtype=jnp.float32)
    be2 = 0.1 * jax.random.normal(ks[8], (out_ch,), dtype=jnp.float32)

    params = (w1, b1, g1, be1, w2, b2, g2, be2)

    out = jax.block_until_ready(jax.jit(encoder_block_forward)(x, params))
    ref = jax.block_until_ready(_reference_forward(x, params))

    assert out.shape == (N, out_ch, H, W), out.shape
    # Default (bf16-multiply / f32-accumulate) MXU precision in both kernel and
    # reference; tolerance sized for that.
    np.testing.assert_allclose(np.asarray(out), np.asarray(ref), rtol=2e-2, atol=2e-2)

    print("KERNEL_OK")
</pallas_src>

<mosaic_0001>
module attributes {stable_mosaic.version = 11 : i64} {
  func.func @_encoder_block_kernel(%arg0: memref<36x64xf32, #tpu.memory_space<vmem>>, %arg1: memref<3x64x128xf32, #tpu.memory_space<vmem>>, %arg2: memref<3x128x128xf32, #tpu.memory_space<vmem>>, %arg3: memref<1x8xf32, #tpu.memory_space<vmem>>, %arg4: memref<1x8xf32, #tpu.memory_space<vmem>>, %arg5: memref<1x8xf32, #tpu.memory_space<vmem>>, %arg6: memref<1x8xf32, #tpu.memory_space<vmem>>, %arg7: memref<128x8xf32, #tpu.memory_space<vmem>>, %arg8: memref<8x128xf32, #tpu.memory_space<vmem>>, %arg9: memref<32x128xf32, #tpu.memory_space<vmem>>) attributes {dimension_semantics = [], scalar_prefetch = 0 : i64, scratch_operands = 0 : i64, tpu.core_type = #tpu.core_type<tc>} {
    %c0 = arith.constant 0 : index
    %c0_0 = arith.constant 0 : index
    %0 = vector.load %arg7[%c0, %c0_0] : memref<128x8xf32, #tpu.memory_space<vmem>>, vector<128x8xf32>
    %c0_1 = arith.constant 0 : index
    %c0_2 = arith.constant 0 : index
    %1 = vector.load %arg8[%c0_1, %c0_2] : memref<8x128xf32, #tpu.memory_space<vmem>>, vector<8x128xf32>
    %c0_3 = arith.constant 0 : index
    %c0_4 = arith.constant 0 : index
    %2 = vector.load %arg0[%c0_3, %c0_4] : memref<36x64xf32, #tpu.memory_space<vmem>>, vector<36x64xf32>
    %3 = vector.extract_strided_slice %2 {offsets = [0, 0], sizes = [32, 64], strides = [1, 1]} : vector<36x64xf32> to vector<32x64xf32>
    %c0_5 = arith.constant 0 : index
    %c0_6 = arith.constant 0 : index
    %c0_7 = arith.constant 0 : index
    %4 = vector.load %arg1[%c0_5, %c0_6, %c0_7] : memref<3x64x128xf32, #tpu.memory_space<vmem>>, vector<1x64x128xf32>
    %5 = vector.shape_cast %4 : vector<1x64x128xf32> to vector<64x128xf32>
    %cst = arith.constant dense<0.000000e+00> : vector<32x128xf32>
    %6 = tpu.matmul %3, %5, %cst {dimension_numbers = #tpu.dot_dimension_numbers<[1], [0], [0], [1], [0, 0, 1, 1], [], []>} : vector<32x64xf32>, vector<64x128xf32>, vector<32x128xf32> -> vector<32x128xf32>
    %7 = vector.extract_strided_slice %2 {offsets = [2, 0], sizes = [32, 64], strides = [1, 1]} : vector<36x64xf32> to vector<32x64xf32>
    %c1 = arith.constant 1 : index
    %c0_8 = arith.constant 0 : index
    %c0_9 = arith.constant 0 : index
    %8 = vector.load %arg1[%c1, %c0_8, %c0_9] : memref<3x64x128xf32, #tpu.memory_space<vmem>>, vector<1x64x128xf32>
    %9 = vector.shape_cast %8 : vector<1x64x128xf32> to vector<64x128xf32>
    %cst_10 = arith.constant dense<0.000000e+00> : vector<32x128xf32>
    %10 = tpu.matmul %7, %9, %cst_10 {dimension_numbers = #tpu.dot_dimension_numbers<[1], [0], [0], [1], [0, 0, 1, 1], [], []>} : vector<32x64xf32>, vector<64x128xf32>, vector<32x128xf32> -> vector<32x128xf32>
    %11 = arith.addf %6, %10 : vector<32x128xf32>
    %12 = vector.extract_strided_slice %2 {offsets = [4, 0], sizes = [32, 64], strides = [1, 1]} : vector<36x64xf32> to vector<32x64xf32>
    %c2 = arith.constant 2 : index
    %c0_11 = arith.constant 0 : index
    %c0_12 = arith.constant 0 : index
    %13 = vector.load %arg1[%c2, %c0_11, %c0_12] : memref<3x64x128xf32, #tpu.memory_space<vmem>>, vector<1x64x128xf32>
    %14 = vector.shape_cast %13 : vector<1x64x128xf32> to vector<64x128xf32>
    %cst_13 = arith.constant dense<0.000000e+00> : vector<32x128xf32>
    %15 = tpu.matmul %12, %14, %cst_13 {dimension_numbers = #tpu.dot_dimension_numbers<[1], [0], [0], [1], [0, 0, 1, 1], [], []>} : vector<32x64xf32>, vector<64x128xf32>, vector<32x128xf32> -> vector<32x128xf32>
    %16 = arith.addf %11, %15 : vector<32x128xf32>
    %cst_14 = arith.constant dense<0.000000e+00> : vector<128xf32>
    %17 = vector.multi_reduction <add>, %16, %cst_14 [0] : vector<32x128xf32> to vector<128xf32>
    %18 = vector.shape_cast %17 : vector<128xf32> to vector<1x128xf32>
    %19 = arith.mulf %16, %16 : vector<32x128xf32>
    %cst_15 = arith.constant dense<0.000000e+00> : vector<128xf32>
    %20 = vector.multi_reduction <add>, %19, %cst_15 [0] : vector<32x128xf32> to vector<128xf32>
    %21 = vector.shape_cast %20 : vector<128xf32> to vector<1x128xf32>
    %cst_16 = arith.constant dense<0.000000e+00> : vector<1x8xf32>
    %22 = tpu.matmul %18, %0, %cst_16 {dimension_numbers = #tpu.dot_dimension_numbers<[1], [0], [0], [1], [0, 0, 1, 1], [], []>} : vector<1x128xf32>, vector<128x8xf32>, vector<1x8xf32> -> vector<1x8xf32>
    %cst_17 = arith.constant 5.120000e+02 : f32
    %23 = vector.broadcast %cst_17 : f32 to vector<1x8xf32>
    %24 = arith.divf %22, %23 : vector<1x8xf32>
    %cst_18 = arith.constant dense<0.000000e+00> : vector<1x8xf32>
    %25 = tpu.matmul %21, %0, %cst_18 {dimension_numbers = #tpu.dot_dimension_numbers<[1], [0], [0], [1], [0, 0, 1, 1], [], []>} : vector<1x128xf32>, vector<128x8xf32>, vector<1x8xf32> -> vector<1x8xf32>
    %cst_19 = arith.constant 5.120000e+02 : f32
    %26 = vector.broadcast %cst_19 : f32 to vector<1x8xf32>
    %27 = arith.divf %25, %26 : vector<1x8xf32>
    %28 = arith.mulf %24, %24 : vector<1x8xf32>
    %29 = arith.subf %27, %28 : vector<1x8xf32>
    %cst_20 = arith.constant 9.99999974E-6 : f32
    %30 = vector.broadcast %cst_20 : f32 to vector<1x8xf32>
    %31 = arith.addf %29, %30 : vector<1x8xf32>
    %32 = math.rsqrt %31 : vector<1x8xf32>
    %c0_21 = arith.constant 0 : index
    %c0_22 = arith.constant 0 : index
    %33 = vector.load %arg3[%c0_21, %c0_22] : memref<1x8xf32, #tpu.memory_space<vmem>>, vector<1x8xf32>
    %34 = arith.mulf %32, %33 : vector<1x8xf32>
    %c0_23 = arith.constant 0 : index
    %c0_24 = arith.constant 0 : index
    %35 = vector.load %arg4[%c0_23, %c0_24] : memref<1x8xf32, #tpu.memory_space<vmem>>, vector<1x8xf32>
    %36 = arith.mulf %24, %34 : vector<1x8xf32>
    %37 = arith.subf %35, %36 : vector<1x8xf32>
    %cst_25 = arith.constant dense<0.000000e+00> : vector<1x128xf32>
    %38 = tpu.matmul %34, %1, %cst_25 {dimension_numbers = #tpu.dot_dimension_numbers<[1], [0], [0], [1], [0, 0, 1, 1], [], []>} : vector<1x8xf32>, vector<8x128xf32>, vector<1x128xf32> -> vector<1x128xf32>
    %cst_26 = arith.constant dense<0.000000e+00> : vector<1x128xf32>
    %39 = tpu.matmul %37, %1, %cst_26 {dimension_numbers = #tpu.dot_dimension_numbers<[1], [0], [0], [1], [0, 0, 1, 1], [], []>} : vector<1x8xf32>, vector<8x128xf32>, vector<1x128xf32> -> vector<1x128xf32>
    %40 = vector.broadcast %38 : vector<1x128xf32> to vector<32x128xf32>
    %41 = arith.mulf %16, %40 : vector<32x128xf32>
    %42 = vector.broadcast %39 : vector<1x128xf32> to vector<32x128xf32>
    %43 = arith.addf %41, %42 : vector<32x128xf32>
    %cst_27 = arith.constant 0.000000e+00 : f32
    %44 = vector.broadcast %cst_27 : f32 to vector<32x128xf32>
    %45 = arith.maximumf %43, %44 : vector<32x128xf32>
    %cst_28 = arith.constant 0.000000e+00 : f32
    %46 = vector.broadcast %cst_28 : f32 to vector<2x128xf32>
    %47 = tpu.concatenate %46, %45, %46 in 0 : vector<2x128xf32>, vector<32x128xf32>, vector<2x128xf32> -> vector<36x128xf32>
    %48 = vector.extract_strided_slice %47 {offsets = [0, 0], sizes = [32, 128], strides = [1, 1]} : vector<36x128xf32> to vector<32x128xf32>
    %c0_29 = arith.constant 0 : index
    %c0_30 = arith.constant 0 : index
    %c0_31 = arith.constant 0 : index
    %49 = vector.load %arg2[%c0_29, %c0_30, %c0_31] : memref<3x128x128xf32, #tpu.memory_space<vmem>>, vector<1x128x128xf32>
    %50 = vector.shape_cast %49 : vector<1x128x128xf32> to vector<128x128xf32>
    %cst_32 = arith.constant dense<0.000000e+00> : vector<32x128xf32>
    %51 = tpu.matmul %48, %50, %cst_32 {dimension_numbers = #tpu.dot_dimension_numbers<[1], [0], [0], [1], [0, 0, 1, 1], [], []>} : vector<32x128xf32>, vector<128x128xf32>, vector<32x128xf32> -> vector<32x128xf32>
    %52 = vector.extract_strided_slice %47 {offsets = [2, 0], sizes = [32, 128], strides = [1, 1]} : vector<36x128xf32> to vector<32x128xf32>
    %c1_33 = arith.constant 1 : index
    %c0_34 = arith.constant 0 : index
    %c0_35 = arith.constant 0 : index
    %53 = vector.load %arg2[%c1_33, %c0_34, %c0_35] : memref<3x128x128xf32, #tpu.memory_space<vmem>>, vector<1x128x128xf32>
    %54 = vector.shape_cast %53 : vector<1x128x128xf32> to vector<128x128xf32>
    %cst_36 = arith.constant dense<0.000000e+00> : vector<32x128xf32>
    %55 = tpu.matmul %52, %54, %cst_36 {dimension_numbers = #tpu.dot_dimension_numbers<[1], [0], [0], [1], [0, 0, 1, 1], [], []>} : vector<32x128xf32>, vector<128x128xf32>, vector<32x128xf32> -> vector<32x128xf32>
    %56 = arith.addf %51, %55 : vector<32x128xf32>
    %57 = vector.extract_strided_slice %47 {offsets = [4, 0], sizes = [32, 128], strides = [1, 1]} : vector<36x128xf32> to vector<32x128xf32>
    %c2_37 = arith.constant 2 : index
    %c0_38 = arith.constant 0 : index
    %c0_39 = arith.constant 0 : index
    %58 = vector.load %arg2[%c2_37, %c0_38, %c0_39] : memref<3x128x128xf32, #tpu.memory_space<vmem>>, vector<1x128x128xf32>
    %59 = vector.shape_cast %58 : vector<1x128x128xf32> to vector<128x128xf32>
    %cst_40 = arith.constant dense<0.000000e+00> : vector<32x128xf32>
    %60 = tpu.matmul %57, %59, %cst_40 {dimension_numbers = #tpu.dot_dimension_numbers<[1], [0], [0], [1], [0, 0, 1, 1], [], []>} : vector<32x128xf32>, vector<128x128xf32>, vector<32x128xf32> -> vector<32x128xf32>
    %61 = arith.addf %56, %60 : vector<32x128xf32>
    %cst_41 = arith.constant dense<0.000000e+00> : vector<128xf32>
    %62 = vector.multi_reduction <add>, %61, %cst_41 [0] : vector<32x128xf32> to vector<128xf32>
    %63 = vector.shape_cast %62 : vector<128xf32> to vector<1x128xf32>
    %64 = arith.mulf %61, %61 : vector<32x128xf32>
    %cst_42 = arith.constant dense<0.000000e+00> : vector<128xf32>
    %65 = vector.multi_reduction <add>, %64, %cst_42 [0] : vector<32x128xf32> to vector<128xf32>
    %66 = vector.shape_cast %65 : vector<128xf32> to vector<1x128xf32>
    %cst_43 = arith.constant dense<0.000000e+00> : vector<1x8xf32>
    %67 = tpu.matmul %63, %0, %cst_43 {dimension_numbers = #tpu.dot_dimension_numbers<[1], [0], [0], [1], [0, 0, 1, 1], [], []>} : vector<1x128xf32>, vector<128x8xf32>, vector<1x8xf32> -> vector<1x8xf32>
    %cst_44 = arith.constant 5.120000e+02 : f32
    %68 = vector.broadcast %cst_44 : f32 to vector<1x8xf32>
    %69 = arith.divf %67, %68 : vector<1x8xf32>
    %cst_45 = arith.constant dense<0.000000e+00> : vector<1x8xf32>
    %70 = tpu.matmul %66, %0, %cst_45 {dimension_numbers = #tpu.dot_dimension_numbers<[1], [0], [0], [1], [0, 0, 1, 1], [], []>} : vector<1x128xf32>, vector<128x8xf32>, vector<1x8xf32> -> vector<1x8xf32>
    %cst_46 = arith.constant 5.120000e+02 : f32
    %71 = vector.broadcast %cst_46 : f32 to vector<1x8xf32>
    %72 = arith.divf %70, %71 : vector<1x8xf32>
    %73 = arith.mulf %69, %69 : vector<1x8xf32>
    %74 = arith.subf %72, %73 : vector<1x8xf32>
    %cst_47 = arith.constant 9.99999974E-6 : f32
    %75 = vector.broadcast %cst_47 : f32 to vector<1x8xf32>
    %76 = arith.addf %74, %75 : vector<1x8xf32>
    %77 = math.rsqrt %76 : vector<1x8xf32>
    %c0_48 = arith.constant 0 : index
    %c0_49 = arith.constant 0 : index
    %78 = vector.load %arg5[%c0_48, %c0_49] : memref<1x8xf32, #tpu.memory_space<vmem>>, vector<1x8xf32>
    %79 = arith.mulf %77, %78 : vector<1x8xf32>
    %c0_50 = arith.constant 0 : index
    %c0_51 = arith.constant 0 : index
    %80 = vector.load %arg6[%c0_50, %c0_51] : memref<1x8xf32, #tpu.memory_space<vmem>>, vector<1x8xf32>
    %81 = arith.mulf %69, %79 : vector<1x8xf32>
    %82 = arith.subf %80, %81 : vector<1x8xf32>
    %cst_52 = arith.constant dense<0.000000e+00> : vector<1x128xf32>
    %83 = tpu.matmul %79, %1, %cst_52 {dimension_numbers = #tpu.dot_dimension_numbers<[1], [0], [0], [1], [0, 0, 1, 1], [], []>} : vector<1x8xf32>, vector<8x128xf32>, vector<1x128xf32> -> vector<1x128xf32>
    %cst_53 = arith.constant dense<0.000000e+00> : vector<1x128xf32>
    %84 = tpu.matmul %82, %1, %cst_53 {dimension_numbers = #tpu.dot_dimension_numbers<[1], [0], [0], [1], [0, 0, 1, 1], [], []>} : vector<1x8xf32>, vector<8x128xf32>, vector<1x128xf32> -> vector<1x128xf32>
    %85 = vector.broadcast %83 : vector<1x128xf32> to vector<32x128xf32>
    %86 = arith.mulf %61, %85 : vector<32x128xf32>
    %87 = vector.broadcast %84 : vector<1x128xf32> to vector<32x128xf32>
    %88 = arith.addf %86, %87 : vector<32x128xf32>
    %cst_54 = arith.constant 0.000000e+00 : f32
    %89 = vector.broadcast %cst_54 : f32 to vector<32x128xf32>
    %90 = arith.maximumf %88, %89 : vector<32x128xf32>
    %c0_55 = arith.constant 0 : index
    %c0_56 = arith.constant 0 : index
    %91 = vector.load %arg9[%c0_55, %c0_56] : memref<32x128xf32, #tpu.memory_space<vmem>>, vector<32x128xf32>
    tpu.vector_store %arg9[%c0_55, %c0_56], %90 {strides = array<i32>} : memref<32x128xf32, #tpu.memory_space<vmem>>, vector<32x128xf32>,
    return
  }
}

</mosaic_0001>

<llo_original>
// kernel: encoder_block_forward.1
$region0: #{encoder_block_forward.1}
  #allocation0 [shape = 'u32[]', space=smem, size = 0x4, offset = 0x4, fixed_abs, tag = 'smem constant byte address 0x4 - core index']
  #allocation1 [shape = 'u32[72,128]{1,0:T(1,128)}', space=vmem, size = 0x9000, scoped, tag = 'internal scratch']
  %s0 = inlined_call_operand.vmem [shape: f32[36,64], index: 0, kind: input, shape index: {}]
  %s1 = inlined_call_operand.vmem [shape: f32[3,64,128], index: 1, kind: input, shape index: {}]
  %s2 = inlined_call_operand.vmem [shape: f32[3,128,128], index: 2, kind: input, shape index: {}]
  %s3 = inlined_call_operand.vmem [shape: f32[1,8], index: 3, kind: input, shape index: {}]
  %s4 = inlined_call_operand.vmem [shape: f32[1,8], index: 4, kind: input, shape index: {}]
  %s5 = inlined_call_operand.vmem [shape: f32[1,8], index: 5, kind: input, shape index: {}]
  %s6 = inlined_call_operand.vmem [shape: f32[1,8], index: 6, kind: input, shape index: {}]
  %s7 = inlined_call_operand.vmem [shape: f32[128,8], index: 7, kind: input, shape index: {}]
  %s8 = inlined_call_operand.vmem [shape: f32[8,128], index: 8, kind: input, shape index: {}]
  %s9 = inlined_call_operand.vmem [shape: f32[32,128], index: 9, kind: output, shape index: {}]
  %s10 = sld [smem:[#allocation0]]
  $region46: #{encoder_block_forward.1} parent=0
    _
  %s12 = ssub.s32 1, %s10
  %s13 = scalar_select 0, %s12, %s10
  // Predicated region
  $region2: #{encoder_block_forward.1} parent=0 // pred_check
    _
  $region3: #{encoder_block_forward.1} parent=0 // pred_check_branch
    %15 = sbr.rel (0) target = $region5
  $region4: #{encoder_block_forward.1} parent=0 // pred_region
    _
  $region5: #{encoder_block_forward.1} parent=0 // pred_fallthru
    _
  // Predicated region
  $region6: #{encoder_block_forward.1} parent=0 // pred_check
    _
  $region7: #{encoder_block_forward.1} parent=0 // pred_check_branch
    %17 = sbr.rel (0) target = $region9
  $region8: #{encoder_block_forward.1} parent=0 // pred_region
    _
  $region9: #{encoder_block_forward.1} parent=0 // pred_fallthru
    _
  // Predicated region
  $region10: #{encoder_block_forward.1} parent=0 // pred_check
    _
  $region11: #{encoder_block_forward.1} parent=0 // pred_check_branch
    %19 = sbr.rel (0) target = $region13
  $region12: #{encoder_block_forward.1} parent=0 // pred_region
    _
  $region13: #{encoder_block_forward.1} parent=0 // pred_fallthru
    _
  // Predicated region
  $region14: #{encoder_block_forward.1} parent=0 // pred_check
    _
  $region15: #{encoder_block_forward.1} parent=0 // pred_check_branch
    %21 = sbr.rel (0) target = $region17
  $region16: #{encoder_block_forward.1} parent=0 // pred_region
    _
  $region17: #{encoder_block_forward.1} parent=0 // pred_fallthru
    _
  // Predicated region
  $region18: #{encoder_block_forward.1} parent=0 // pred_check
    _
  $region19: #{encoder_block_forward.1} parent=0 // pred_check_branch
    %23 = sbr.rel (0) target = $region21
  $region20: #{encoder_block_forward.1} parent=0 // pred_region
    _
  $region21: #{encoder_block_forward.1} parent=0 // pred_fallthru
    _
  // Predicated region
  $region22: #{encoder_block_forward.1} parent=0 // pred_check
    _
  $region23: #{encoder_block_forward.1} parent=0 // pred_check_branch
    %25 = sbr.rel (0) target = $region25
  $region24: #{encoder_block_forward.1} parent=0 // pred_region
    _
  $region25: #{encoder_block_forward.1} parent=0 // pred_fallthru
    _
  // Predicated region
  $region26: #{encoder_block_forward.1} parent=0 // pred_check
    _
  $region27: #{encoder_block_forward.1} parent=0 // pred_check_branch
    %27 = sbr.rel (0) target = $region29
  $region28: #{encoder_block_forward.1} parent=0 // pred_region
    _
  $region29: #{encoder_block_forward.1} parent=0 // pred_fallthru
    _
  // Predicated region
  $region30: #{encoder_block_forward.1} parent=0 // pred_check
    _
  $region31: #{encoder_block_forward.1} parent=0 // pred_check_branch
    %29 = sbr.rel (0) target = $region33
  $region32: #{encoder_block_forward.1} parent=0 // pred_region
    _
  $region33: #{encoder_block_forward.1} parent=0 // pred_fallthru
    _
  // Predicated region
  $region34: #{encoder_block_forward.1} parent=0 // pred_check
    _
  $region35: #{encoder_block_forward.1} parent=0 // pred_check_branch
    %31 = sbr.rel (0) target = $region37
  $region36: #{encoder_block_forward.1} parent=0 // pred_region
    _
  $region37: #{encoder_block_forward.1} parent=0 // pred_fallthru
    _
  %v32 = vld [vmem:[%s7] sm:$0xff]
  %v33 = vld [vmem:[%s7 + $0x8] sm:$0xff]
  %v34 = vld [vmem:[%s7 + $0x10] sm:$0xff]
  %v35 = vld [vmem:[%s7 + $0x18] sm:$0xff]
  %v36 = vld [vmem:[%s7 + $0x20] sm:$0xff]
  %v37 = vld [vmem:[%s7 + $0x28] sm:$0xff]
  %v38 = vld [vmem:[%s7 + $0x30] sm:$0xff]
  %v39 = vld [vmem:[%s7 + $0x38] sm:$0xff]
  %v40 = vld [vmem:[%s7 + $0x40] sm:$0xff]
  %v41 = vld [vmem:[%s7 + $0x48] sm:$0xff]
  %v42 = vld [vmem:[%s7 + $0x50] sm:$0xff]
  %v43 = vld [vmem:[%s7 + $0x58] sm:$0xff]
  %v44 = vld [vmem:[%s7 + $0x60] sm:$0xff]
  %v45 = vld [vmem:[%s7 + $0x68] sm:$0xff]
  %v46 = vld [vmem:[%s7 + $0x70] sm:$0xff]
  %v47 = vld [vmem:[%s7 + $0x78] sm:$0xff]
  %v48 = vld [vmem:[%s8] sm:$0xff]
  %v49 = vld [vmem:[%s0] sm:$0xff]
  %v50 = vld [vmem:[%s0 + $0x8] sm:$0xff]
  %v51 = vld [vmem:[%s0 + $0x10] sm:$0xff]
  %v52 = vld [vmem:[%s0 + $0x18] sm:$0xff]
  %v53 = vld [vmem:[%s0 + $0x20] sm:$0xf]
  %v54 = vld [vmem:[%s1] sm:$0xff]
  %v55 = vld [vmem:[%s1 + $0x8] sm:$0xff]
  %v56 = vld [vmem:[%s1 + $0x10] sm:$0xff]
  %v57 = vld [vmem:[%s1 + $0x18] sm:$0xff]
  %v58 = vld [vmem:[%s1 + $0x20] sm:$0xff]
  %v59 = vld [vmem:[%s1 + $0x28] sm:$0xff]
  %v60 = vld [vmem:[%s1 + $0x30] sm:$0xff]
  %v61 = vld [vmem:[%s1 + $0x38] sm:$0xff]
  %s62 = scalar_lea.vmem %s1, 64
  %v63 = vld [vmem:[%s62] sm:$0xff]
  %v64 = vld [vmem:[%s62 + $0x8] sm:$0xff]
  %v65 = vld [vmem:[%s62 + $0x10] sm:$0xff]
  %v66 = vld [vmem:[%s62 + $0x18] sm:$0xff]
  %v67 = vld [vmem:[%s62 + $0x20] sm:$0xff]
  %v68 = vld [vmem:[%s62 + $0x28] sm:$0xff]
  %v69 = vld [vmem:[%s62 + $0x30] sm:$0xff]
  %v70 = vld [vmem:[%s62 + $0x38] sm:$0xff]
  %vm76 = vcmask 1045504
  %v77 = vrot.slane %v49, 2
  %v78 = vrot.slane %v50, 2
  %v79 = vsel %vm76, %v77, %v78
  %v80 = vrot.slane %v51, 2
  %v81 = vsel %vm76, %v78, %v80
  %v82 = vrot.slane %v52, 2
  %v83 = vsel %vm76, %v80, %v82
  %v84 = vrot.slane %v53, 2
  %v85 = vsel %vm76, %v82, %v84
  %vm86 = vcmask 523264
  %v87 = vsel %vm86, %v79, 0
  %v89 = vsel %vm86, %v81, 0
  %v91 = vsel %vm86, %v83, 0
  %v93 = vsel %vm86, %v85, 0
  %95 = vmatpush.msra.mxu0 0.0
  %96 = vmatpush.msra.mxu0 0.0
  %97 = vmatpush.msra.mxu0 0.0
  %98 = vmatpush.msra.mxu0 0.0
  %99 = vmatpush.msra.mxu0 0.0
  %100 = vmatpush.msra.mxu0 0.0
  %101 = vmatpush.msra.mxu0 0.0
  %102 = vmatpush.msra.mxu0 0.0
  %103 = vmatpush.msra.mxu0 %v70
  %104 = vmatpush.msra.mxu0 %v69
  %105 = vmatpush.msra.mxu0 %v68
  %106 = vmatpush.msra.mxu0 %v67
  %107 = vmatpush.msra.mxu0 %v66
  %108 = vmatpush.msra.mxu0 %v65
  %109 = vmatpush.msra.mxu0 %v64
  %110 = vmatpush.msra.mxu0 %v63
  %111 = vmatmul.f32.gmra.mxu0 %v87
  %v112 = vpop.f32.mrf.mxu0
  %v113 = vadd.f32 0.0, %v112
  %114 = vmatmul.f32.gmra.mxu0 %v89
  %v115 = vpop.f32.mrf.mxu0
  %v116 = vadd.f32 0.0, %v115
  %117 = vmatmul.f32.gmra.mxu0 %v91
  %v118 = vpop.f32.mrf.mxu0
  %v119 = vadd.f32 0.0, %v118
  %120 = vmatmul.f32.gmra.mxu0 %v93
  %v121 = vpop.f32.mrf.mxu0
  %v122 = vadd.f32 0.0, %v121
  %123 = vdwg.mxu0
  %v124 = vsel %vm86, %v49, 0
  %v126 = vsel %vm86, %v50, 0
  %v128 = vsel %vm86, %v51, 0
  %v130 = vsel %vm86, %v52, 0
  %132 = vmatpush.msra.mxu0 0.0
  %133 = vmatpush.msra.mxu0 0.0
  %134 = vmatpush.msra.mxu0 0.0
  %135 = vmatpush.msra.mxu0 0.0
  %136 = vmatpush.msra.mxu0 0.0
  %137 = vmatpush.msra.mxu0 0.0
  %138 = vmatpush.msra.mxu0 0.0
  %139 = vmatpush.msra.mxu0 0.0
  %140 = vmatpush.msra.mxu0 %v61
  %141 = vmatpush.msra.mxu0 %v60
  %142 = vmatpush.msra.mxu0 %v59
  %143 = vmatpush.msra.mxu0 %v58
  %144 = vmatpush.msra.mxu0 %v57
  %145 = vmatpush.msra.mxu0 %v56
  %146 = vmatpush.msra.mxu0 %v55
  %147 = vmatpush.msra.mxu0 %v54
  %148 = vmatmul.f32.gmra.mxu0 %v124
  %v149 = vpop.f32.mrf.mxu0
  %v150 = vadd.f32 %v113, %v149
  %151 = vmatmul.f32.gmra.mxu0 %v126
  %v152 = vpop.f32.mrf.mxu0
  %v153 = vadd.f32 %v116, %v152
  %154 = vmatmul.f32.gmra.mxu0 %v128
  %v155 = vpop.f32.mrf.mxu0
  %v156 = vadd.f32 %v119, %v155
  %157 = vmatmul.f32.gmra.mxu0 %v130
  %v158 = vpop.f32.mrf.mxu0
  %v159 = vadd.f32 %v122, %v158
  %160 = vdwg.mxu0
  %s161 = scalar_lea.vmem %s1, 128
  %v162 = vld [vmem:[%s161] sm:$0xff]
  %v163 = vld [vmem:[%s161 + $0x8] sm:$0xff]
  %v164 = vld [vmem:[%s161 + $0x10] sm:$0xff]
  %v165 = vld [vmem:[%s161 + $0x18] sm:$0xff]
  %v166 = vld [vmem:[%s161 + $0x20] sm:$0xff]
  %v167 = vld [vmem:[%s161 + $0x28] sm:$0xff]
  %v168 = vld [vmem:[%s161 + $0x30] sm:$0xff]
  %v169 = vld [vmem:[%s161 + $0x38] sm:$0xff]
  %vm170 = vcmask 1043456
  %v171 = vrot.slane %v49, 4
  %v172 = vrot.slane %v50, 4
  %v173 = vsel %vm170, %v171, %v172
  %v174 = vrot.slane %v51, 4
  %v175 = vsel %vm170, %v172, %v174
  %v176 = vrot.slane %v52, 4
  %v177 = vsel %vm170, %v174, %v176
  %v178 = vrot.slane %v53, 4
  %v179 = vsel %vm170, %v176, %v178
  %v180 = vsel %vm86, %v173, 0
  %v182 = vsel %vm86, %v175, 0
  %v184 = vsel %vm86, %v177, 0
  %v186 = vsel %vm86, %v179, 0
  %188 = vmatpush.msra.mxu0 0.0
  %189 = vmatpush.msra.mxu0 0.0
  %190 = vmatpush.msra.mxu0 0.0
  %191 = vmatpush.msra.mxu0 0.0
  %192 = vmatpush.msra.mxu0 0.0
  %193 = vmatpush.msra.mxu0 0.0
  %194 = vmatpush.msra.mxu0 0.0
  %195 = vmatpush.msra.mxu0 0.0
  %196 = vmatpush.msra.mxu0 %v169
  %197 = vmatpush.msra.mxu0 %v168
  %198 = vmatpush.msra.mxu0 %v167
  %199 = vmatpush.msra.mxu0 %v166
  %200 = vmatpush.msra.mxu0 %v165
  %201 = vmatpush.msra.mxu0 %v164
  %202 = vmatpush.msra.mxu0 %v163
  %203 = vmatpush.msra.mxu0 %v162
  %204 = vmatmul.f32.gmra.mxu0 %v180
  %v205 = vpop.f32.mrf.mxu0
  %v206 = vadd.f32 0.0, %v205
  %207 = vmatmul.f32.gmra.mxu0 %v182
  %v208 = vpop.f32.mrf.mxu0
  %v209 = vadd.f32 0.0, %v208
  %210 = vmatmul.f32.gmra.mxu0 %v184
  %v211 = vpop.f32.mrf.mxu0
  %v212 = vadd.f32 0.0, %v211
  %213 = vmatmul.f32.gmra.mxu0 %v186
  %v214 = vpop.f32.mrf.mxu0
  %v215 = vadd.f32 0.0, %v214
  %216 = vdwg.mxu0
  %v217 = vadd.f32 %v150, %v206
  %v218 = vadd.f32 %v153, %v209
  %v219 = vadd.f32 %v156, %v212
  %v220 = vadd.f32 %v159, %v215
  %v221 = vadd.f32 %v217, %v218
  %v222 = vadd.f32 %v221, %v219
  %v223 = vadd.f32 %v222, %v220
  %v224 = vrot.slane %v223, 4
  %v225 = vadd.f32 %v223, %v224
  %v226 = vrot.slane %v225, 2
  %v227 = vadd.f32 %v225, %v226
  %v228 = vrot.slane %v227, 1
  %v229 = vadd.f32 %v227, %v228
  %v230 = vmul.f32 %v217, %v217
  %v231 = vmul.f32 %v218, %v218
  %v232 = vmul.f32 %v219, %v219
  %v233 = vmul.f32 %v220, %v220
  %v234 = vadd.f32 %v230, %v231
  %v235 = vadd.f32 %v234, %v232
  %v236 = vadd.f32 %v235, %v233
  %v237 = vrot.slane %v236, 4
  %v238 = vadd.f32 %v236, %v237
  %v239 = vrot.slane %v238, 2
  %v240 = vadd.f32 %v238, %v239
  %v241 = vrot.slane %v240, 1
  %v242 = vadd.f32 %v240, %v241
  %243 = vmatpush.msra.mxu0 %v47
  %244 = vmatpush.msra.mxu0 %v46
  %245 = vmatpush.msra.mxu0 %v45
  %246 = vmatpush.msra.mxu0 %v44
  %247 = vmatpush.msra.mxu0 %v43
  %248 = vmatpush.msra.mxu0 %v42
  %249 = vmatpush.msra.mxu0 %v41
  %250 = vmatpush.msra.mxu0 %v40
  %251 = vmatpush.msra.mxu0 %v39
  %252 = vmatpush.msra.mxu0 %v38
  %253 = vmatpush.msra.mxu0 %v37
  %254 = vmatpush.msra.mxu0 %v36
  %255 = vmatpush.msra.mxu0 %v35
  %256 = vmatpush.msra.mxu0 %v34
  %257 = vmatpush.msra.mxu0 %v33
  %258 = vmatpush.msra.mxu0 %v32
  %259 = vmatmul.f32.gmra.mxu0 %v229
  %v260 = vpop.f32.mrf.mxu0
  %v261 = vadd.f32 0.0, %v260
  %262 = vdwg.mxu0
  %v263 = vrcp.pop 512.0
  %v264 = vmul.f32 512.0, %v263
  %v265 = vsub.f32 1.0, %v264
  %v266 = vmul.f32 %v263, %v265
  %v267 = vadd.f32 %v263, %v266
  %vm268 = vweird.f32 %v263
  %v269 = vsel %vm268, %v263, %v267
  %v270 = vmul.f32 %v261, %v269
  %271 = vmatpush.msra.mxu0 %v47
  %272 = vmatpush.msra.mxu0 %v46
  %273 = vmatpush.msra.mxu0 %v45
  %274 = vmatpush.msra.mxu0 %v44
  %275 = vmatpush.msra.mxu0 %v43
  %276 = vmatpush.msra.mxu0 %v42
  %277 = vmatpush.msra.mxu0 %v41
  %278 = vmatpush.msra.mxu0 %v40
  %279 = vmatpush.msra.mxu0 %v39
  %280 = vmatpush.msra.mxu0 %v38
  %281 = vmatpush.msra.mxu0 %v37
  %282 = vmatpush.msra.mxu0 %v36
  %283 = vmatpush.msra.mxu0 %v35
  %284 = vmatpush.msra.mxu0 %v34
  %285 = vmatpush.msra.mxu0 %v33
  %286 = vmatpush.msra.mxu0 %v32
  %287 = vmatmul.f32.gmra.mxu0 %v242
  %v288 = vpop.f32.mrf.mxu0
  %v289 = vadd.f32 0.0, %v288
  %290 = vdwg.mxu0
  %v291 = vmul.f32 %v289, %v269
  %v292 = vmul.f32 %v270, %v270
  %v293 = vsub.f32 %v291, %v292
  %v294 = vadd.f32 %v293, 1e-05
  %v295 = vrsqrt.pop %v294
  %v296 = vmul.f32 %v295, %v294
  %v297 = vmul.f32 %v296, %v295
  %v298 = vmul.f32 0.5, %v297
  %v299 = vsub.f32 1.5, %v298
  %v300 = vmul.f32 %v295, %v299
  %vm301 = vweird.f32 %v294
  %vm302 = vweird.f32 %v295
  %vm303 = vmor %vm301, %vm302
  %v304 = vsel %vm303, %v295, %v300
  %v305 = vld [vmem:[%s3] sm:$0x1]
  %v306 = vmul.f32 %v304, %v305
  %v307 = vld [vmem:[%s4] sm:$0x1]
  %v308 = vmul.f32 %v270, %v306
  %v309 = vsub.f32 %v307, %v308
  %vm310 = vcmask 64512
  %v312 = vsel %vm310, %v306, 0
  %314 = vmatpush.msra.mxu0 0.0
  %315 = vmatpush.msra.mxu0 0.0
  %316 = vmatpush.msra.mxu0 0.0
  %317 = vmatpush.msra.mxu0 0.0
  %318 = vmatpush.msra.mxu0 0.0
  %319 = vmatpush.msra.mxu0 0.0
  %320 = vmatpush.msra.mxu0 0.0
  %321 = vmatpush.msra.mxu0 0.0
  %322 = vmatpush.msra.mxu0 0.0
  %323 = vmatpush.msra.mxu0 0.0
  %324 = vmatpush.msra.mxu0 0.0
  %325 = vmatpush.msra.mxu0 0.0
  %326 = vmatpush.msra.mxu0 0.0
  %327 = vmatpush.msra.mxu0 0.0
  %328 = vmatpush.msra.mxu0 0.0
  %329 = vmatpush.msra.mxu0 %v48
  %330 = vmatmul.f32.gmra.mxu0 %v312
  %v331 = vpop.f32.mrf.mxu0
  %v332 = vadd.f32 0.0, %v331
  %333 = vdwg.mxu0
  %v335 = vsel %vm310, %v309, 0
  %337 = vmatpush.msra.mxu0 0.0
  %338 = vmatpush.msra.mxu0 0.0
  %339 = vmatpush.msra.mxu0 0.0
  %340 = vmatpush.msra.mxu0 0.0
  %341 = vmatpush.msra.mxu0 0.0
  %342 = vmatpush.msra.mxu0 0.0
  %343 = vmatpush.msra.mxu0 0.0
  %344 = vmatpush.msra.mxu0 0.0
  %345 = vmatpush.msra.mxu0 0.0
  %346 = vmatpush.msra.mxu0 0.0
  %347 = vmatpush.msra.mxu0 0.0
  %348 = vmatpush.msra.mxu0 0.0
  %349 = vmatpush.msra.mxu0 0.0
  %350 = vmatpush.msra.mxu0 0.0
  %351 = vmatpush.msra.mxu0 0.0
  %352 = vmatpush.msra.mxu0 %v48
  %353 = vmatmul.f32.gmra.mxu0 %v335
  %v354 = vpop.f32.mrf.mxu0
  %v355 = vadd.f32 0.0, %v354
  %356 = vdwg.mxu0
  %v357 = vperm.slane %v332, 0
  %v358 = vmul.f32 %v217, %v357
  %v359 = vmul.f32 %v218, %v357
  %v360 = vmul.f32 %v219, %v357
  %v361 = vmul.f32 %v220, %v357
  %v362 = vperm.slane %v355, 0
  %v363 = vadd.f32 %v358, %v362
  %v364 = vadd.f32 %v359, %v362
  %v365 = vadd.f32 %v360, %v362
  %v366 = vadd.f32 %v361, %v362
  %v367 = vmax.f32 %v363, 0.0
  %v368 = vmax.f32 %v364, 0.0
  %v369 = vmax.f32 %v365, 0.0
  %v370 = vmax.f32 %v366, 0.0
  %vm375 = vcmask 1041408
  %v376 = vrot.slane %v367, 6
  %v377 = vrot.slane %v368, 6
  %v378 = vsel %vm375, %v376, %v377
  %v379 = vrot.slane %v369, 6
  %v380 = vsel %vm375, %v377, %v379
  %v381 = vrot.slane %v370, 6
  %v382 = vsel %vm375, %v379, %v381
  %v388 = vsel %vm375, 0.0, %v376
  %v389 = vsel %vm375, %v381, 0.0
  %v390 = vld [vmem:[%s2] sm:$0xff]
  %v391 = vld [vmem:[%s2 + $0x8] sm:$0xff]
  %v392 = vld [vmem:[%s2 + $0x10] sm:$0xff]
  %v393 = vld [vmem:[%s2 + $0x18] sm:$0xff]
  %v394 = vld [vmem:[%s2 + $0x20] sm:$0xff]
  %v395 = vld [vmem:[%s2 + $0x28] sm:$0xff]
  %v396 = vld [vmem:[%s2 + $0x30] sm:$0xff]
  %v397 = vld [vmem:[%s2 + $0x38] sm:$0xff]
  %v398 = vld [vmem:[%s2 + $0x40] sm:$0xff]
  %v399 = vld [vmem:[%s2 + $0x48] sm:$0xff]
  %v400 = vld [vmem:[%s2 + $0x50] sm:$0xff]
  %v401 = vld [vmem:[%s2 + $0x58] sm:$0xff]
  %v402 = vld [vmem:[%s2 + $0x60] sm:$0xff]
  %v403 = vld [vmem:[%s2 + $0x68] sm:$0xff]
  %v404 = vld [vmem:[%s2 + $0x70] sm:$0xff]
  %v405 = vld [vmem:[%s2 + $0x78] sm:$0xff]
  %s406 = scalar_lea.vmem %s2, 128
  %v407 = vld [vmem:[%s406] sm:$0xff]
  %v408 = vld [vmem:[%s406 + $0x8] sm:$0xff]
  %v409 = vld [vmem:[%s406 + $0x10] sm:$0xff]
  %v410 = vld [vmem:[%s406 + $0x18] sm:$0xff]
  %v411 = vld [vmem:[%s406 + $0x20] sm:$0xff]
  %v412 = vld [vmem:[%s406 + $0x28] sm:$0xff]
  %v413 = vld [vmem:[%s406 + $0x30] sm:$0xff]
  %v414 = vld [vmem:[%s406 + $0x38] sm:$0xff]
  %v415 = vld [vmem:[%s406 + $0x40] sm:$0xff]
  %v416 = vld [vmem:[%s406 + $0x48] sm:$0xff]
  %v417 = vld [vmem:[%s406 + $0x50] sm:$0xff]
  %v418 = vld [vmem:[%s406 + $0x58] sm:$0xff]
  %v419 = vld [vmem:[%s406 + $0x60] sm:$0xff]
  %v420 = vld [vmem:[%s406 + $0x68] sm:$0xff]
  %v421 = vld [vmem:[%s406 + $0x70] sm:$0xff]
  %v422 = vld [vmem:[%s406 + $0x78] sm:$0xff]
  %v425 = vrot.slane %v388, 2
  %v426 = vrot.slane %v378, 2
  %v427 = vsel %vm76, %v425, %v426
  %v428 = vrot.slane %v380, 2
  %v429 = vsel %vm76, %v426, %v428
  %v430 = vrot.slane %v382, 2
  %v431 = vsel %vm76, %v428, %v430
  %v432 = vrot.slane %v389, 2
  %v433 = vsel %vm76, %v430, %v432
  %438 = vmatpush.msra.mxu0 %v422
  %439 = vmatpush.msra.mxu0 %v421
  %440 = vmatpush.msra.mxu0 %v420
  %441 = vmatpush.msra.mxu0 %v419
  %442 = vmatpush.msra.mxu0 %v418
  %443 = vmatpush.msra.mxu0 %v417
  %444 = vmatpush.msra.mxu0 %v416
  %445 = vmatpush.msra.mxu0 %v415
  %446 = vmatpush.msra.mxu0 %v414
  %447 = vmatpush.msra.mxu0 %v413
  %448 = vmatpush.msra.mxu0 %v412
  %449 = vmatpush.msra.mxu0 %v411
  %450 = vmatpush.msra.mxu0 %v410
  %451 = vmatpush.msra.mxu0 %v409
  %452 = vmatpush.msra.mxu0 %v408
  %453 = vmatpush.msra.mxu0 %v407
  %454 = vmatmul.f32.gmra.mxu0 %v427
  %v455 = vpop.f32.mrf.mxu0
  %v456 = vadd.f32 0.0, %v455
  %457 = vmatmul.f32.gmra.mxu0 %v429
  %v458 = vpop.f32.mrf.mxu0
  %v459 = vadd.f32 0.0, %v458
  %460 = vmatmul.f32.gmra.mxu0 %v431
  %v461 = vpop.f32.mrf.mxu0
  %v462 = vadd.f32 0.0, %v461
  %463 = vmatmul.f32.gmra.mxu0 %v433
  %v464 = vpop.f32.mrf.mxu0
  %v465 = vadd.f32 0.0, %v464
  %466 = vdwg.mxu0
  %467 = vmatpush.msra.mxu0 %v405
  %468 = vmatpush.msra.mxu0 %v404
  %469 = vmatpush.msra.mxu0 %v403
  %470 = vmatpush.msra.mxu0 %v402
  %471 = vmatpush.msra.mxu0 %v401
  %472 = vmatpush.msra.mxu0 %v400
  %473 = vmatpush.msra.mxu0 %v399
  %474 = vmatpush.msra.mxu0 %v398
  %475 = vmatpush.msra.mxu0 %v397
  %476 = vmatpush.msra.mxu0 %v396
  %477 = vmatpush.msra.mxu0 %v395
  %478 = vmatpush.msra.mxu0 %v394
  %479 = vmatpush.msra.mxu0 %v393
  %480 = vmatpush.msra.mxu0 %v392
  %481 = vmatpush.msra.mxu0 %v391
  %482 = vmatpush.msra.mxu0 %v390
  %483 = vmatmul.f32.gmra.mxu0 %v388
  %v484 = vpop.f32.mrf.mxu0
  %v485 = vadd.f32 %v456, %v484
  %486 = vmatmul.f32.gmra.mxu0 %v378
  %v487 = vpop.f32.mrf.mxu0
  %v488 = vadd.f32 %v459, %v487
  %489 = vmatmul.f32.gmra.mxu0 %v380
  %v490 = vpop.f32.mrf.mxu0
  %v491 = vadd.f32 %v462, %v490
  %492 = vmatmul.f32.gmra.mxu0 %v382
  %v493 = vpop.f32.mrf.mxu0
  %v494 = vadd.f32 %v465, %v493
  %495 = vdwg.mxu0
  %s496 = scalar_lea.vmem %s2, 256
  %v497 = vld [vmem:[%s496] sm:$0xff]
  %v498 = vld [vmem:[%s496 + $0x8] sm:$0xff]
  %v499 = vld [vmem:[%s496 + $0x10] sm:$0xff]
  %v500 = vld [vmem:[%s496 + $0x18] sm:$0xff]
  %v501 = vld [vmem:[%s496 + $0x20] sm:$0xff]
  %v502 = vld [vmem:[%s496 + $0x28] sm:$0xff]
  %v503 = vld [vmem:[%s496 + $0x30] sm:$0xff]
  %v504 = vld [vmem:[%s496 + $0x38] sm:$0xff]
  %v505 = vld [vmem:[%s496 + $0x40] sm:$0xff]
  %v506 = vld [vmem:[%s496 + $0x48] sm:$0xff]
  %v507 = vld [vmem:[%s496 + $0x50] sm:$0xff]
  %v508 = vld [vmem:[%s496 + $0x58] sm:$0xff]
  %v509 = vld [vmem:[%s496 + $0x60] sm:$0xff]
  %v510 = vld [vmem:[%s496 + $0x68] sm:$0xff]
  %v511 = vld [vmem:[%s496 + $0x70] sm:$0xff]
  %v512 = vld [vmem:[%s496 + $0x78] sm:$0xff]
  %v513 = vrot.slane %v388, 4
  %v514 = vrot.slane %v378, 4
  %v515 = vsel %vm170, %v513, %v514
  %v516 = vrot.slane %v380, 4
  %v517 = vsel %vm170, %v514, %v516
  %v518 = vrot.slane %v382, 4
  %v519 = vsel %vm170, %v516, %v518
  %v520 = vrot.slane %v389, 4
  %v521 = vsel %vm170, %v518, %v520
  %526 = vmatpush.msra.mxu0 %v512
  %527 = vmatpush.msra.mxu0 %v511
  %528 = vmatpush.msra.mxu0 %v510
  %529 = vmatpush.msra.mxu0 %v509
  %530 = vmatpush.msra.mxu0 %v508
  %531 = vmatpush.msra.mxu0 %v507
  %532 = vmatpush.msra.mxu0 %v506
  %533 = vmatpush.msra.mxu0 %v505
  %534 = vmatpush.msra.mxu0 %v504
  %535 = vmatpush.msra.mxu0 %v503
  %536 = vmatpush.msra.mxu0 %v502
  %537 = vmatpush.msra.mxu0 %v501
  %538 = vmatpush.msra.mxu0 %v500
  %539 = vmatpush.msra.mxu0 %v499
  %540 = vmatpush.msra.mxu0 %v498
  %541 = vmatpush.msra.mxu0 %v497
  %542 = vmatmul.f32.gmra.mxu0 %v515
  %v543 = vpop.f32.mrf.mxu0
  %v544 = vadd.f32 0.0, %v543
  %545 = vmatmul.f32.gmra.mxu0 %v517
  %v546 = vpop.f32.mrf.mxu0
  %v547 = vadd.f32 0.0, %v546
  %548 = vmatmul.f32.gmra.mxu0 %v519
  %v549 = vpop.f32.mrf.mxu0
  %v550 = vadd.f32 0.0, %v549
  %551 = vmatmul.f32.gmra.mxu0 %v521
  %v552 = vpop.f32.mrf.mxu0
  %v553 = vadd.f32 0.0, %v552
  %554 = vdwg.mxu0
  %v555 = vadd.f32 %v485, %v544
  %v556 = vadd.f32 %v488, %v547
  %v557 = vadd.f32 %v491, %v550
  %v558 = vadd.f32 %v494, %v553
  %v559 = vadd.f32 %v555, %v556
  %v560 = vadd.f32 %v559, %v557
  %v561 = vadd.f32 %v560, %v558
  %v562 = vrot.slane %v561, 4
  %v563 = vadd.f32 %v561, %v562
  %v564 = vrot.slane %v563, 2
  %v565 = vadd.f32 %v563, %v564
  %v566 = vrot.slane %v565, 1
  %v567 = vadd.f32 %v565, %v566
  %v568 = vmul.f32 %v555, %v555
  %v569 = vmul.f32 %v556, %v556
  %v570 = vmul.f32 %v557, %v557
  %v571 = vmul.f32 %v558, %v558
  %v572 = vadd.f32 %v568, %v569
  %v573 = vadd.f32 %v572, %v570
  %v574 = vadd.f32 %v573, %v571
  %v575 = vrot.slane %v574, 4
  %v576 = vadd.f32 %v574, %v575
  %v577 = vrot.slane %v576, 2
  %v578 = vadd.f32 %v576, %v577
  %v579 = vrot.slane %v578, 1
  %v580 = vadd.f32 %v578, %v579
  %581 = vmatpush.msra.mxu0 %v47
  %582 = vmatpush.msra.mxu0 %v46
  %583 = vmatpush.msra.mxu0 %v45
  %584 = vmatpush.msra.mxu0 %v44
  %585 = vmatpush.msra.mxu0 %v43
  %586 = vmatpush.msra.mxu0 %v42
  %587 = vmatpush.msra.mxu0 %v41
  %588 = vmatpush.msra.mxu0 %v40
  %589 = vmatpush.msra.mxu0 %v39
  %590 = vmatpush.msra.mxu0 %v38
  %591 = vmatpush.msra.mxu0 %v37
  %592 = vmatpush.msra.mxu0 %v36
  %593 = vmatpush.msra.mxu0 %v35
  %594 = vmatpush.msra.mxu0 %v34
  %595 = vmatpush.msra.mxu0 %v33
  %596 = vmatpush.msra.mxu0 %v32
  %597 = vmatmul.f32.gmra.mxu0 %v567
  %v598 = vpop.f32.mrf.mxu0
  %v599 = vadd.f32 0.0, %v598
  %600 = vdwg.mxu0
  %v601 = vmul.f32 %v599, %v269
  %602 = vmatpush.msra.mxu0 %v47
  %603 = vmatpush.msra.mxu0 %v46
  %604 = vmatpush.msra.mxu0 %v45
  %605 = vmatpush.msra.mxu0 %v44
  %606 = vmatpush.msra.mxu0 %v43
  %607 = vmatpush.msra.mxu0 %v42
  %608 = vmatpush.msra.mxu0 %v41
  %609 = vmatpush.msra.mxu0 %v40
  %610 = vmatpush.msra.mxu0 %v39
  %611 = vmatpush.msra.mxu0 %v38
  %612 = vmatpush.msra.mxu0 %v37
  %613 = vmatpush.msra.mxu0 %v36
  %614 = vmatpush.msra.mxu0 %v35
  %615 = vmatpush.msra.mxu0 %v34
  %616 = vmatpush.msra.mxu0 %v33
  %617 = vmatpush.msra.mxu0 %v32
  %618 = vmatmul.f32.gmra.mxu0 %v580
  %v619 = vpop.f32.mrf.mxu0
  %v620 = vadd.f32 0.0, %v619
  %621 = vdwg.mxu0
  %v622 = vmul.f32 %v620, %v269
  %v623 = vmul.f32 %v601, %v601
  %v624 = vsub.f32 %v622, %v623
  %v625 = vadd.f32 %v624, 1e-05
  %v626 = vrsqrt.pop %v625
  %v627 = vmul.f32 %v626, %v625
  %v628 = vmul.f32 %v627, %v626
  %v629 = vmul.f32 0.5, %v628
  %v630 = vsub.f32 1.5, %v629
  %v631 = vmul.f32 %v626, %v630
  %vm632 = vweird.f32 %v625
  %vm633 = vweird.f32 %v626
  %vm634 = vmor %vm632, %vm633
  %v635 = vsel %vm634, %v626, %v631
  %v636 = vld [vmem:[%s5] sm:$0x1]
  %v637 = vmul.f32 %v635, %v636
  %v638 = vld [vmem:[%s6] sm:$0x1]
  %v639 = vmul.f32 %v601, %v637
  %v640 = vsub.f32 %v638, %v639
  %v642 = vsel %vm310, %v637, 0
  %644 = vmatpush.msra.mxu0 0.0
  %645 = vmatpush.msra.mxu0 0.0
  %646 = vmatpush.msra.mxu0 0.0
  %647 = vmatpush.msra.mxu0 0.0
  %648 = vmatpush.msra.mxu0 0.0
  %649 = vmatpush.msra.mxu0 0.0
  %650 = vmatpush.msra.mxu0 0.0
  %651 = vmatpush.msra.mxu0 0.0
  %652 = vmatpush.msra.mxu0 0.0
  %653 = vmatpush.msra.mxu0 0.0
  %654 = vmatpush.msra.mxu0 0.0
  %655 = vmatpush.msra.mxu0 0.0
  %656 = vmatpush.msra.mxu0 0.0
  %657 = vmatpush.msra.mxu0 0.0
  %658 = vmatpush.msra.mxu0 0.0
  %659 = vmatpush.msra.mxu0 %v48
  %660 = vmatmul.f32.gmra.mxu0 %v642
  %v661 = vpop.f32.mrf.mxu0
  %v662 = vadd.f32 0.0, %v661
  %663 = vdwg.mxu0
  %v665 = vsel %vm310, %v640, 0
  %667 = vmatpush.msra.mxu0 0.0
  %668 = vmatpush.msra.mxu0 0.0
  %669 = vmatpush.msra.mxu0 0.0
  %670 = vmatpush.msra.mxu0 0.0
  %671 = vmatpush.msra.mxu0 0.0
  %672 = vmatpush.msra.mxu0 0.0
  %673 = vmatpush.msra.mxu0 0.0
  %674 = vmatpush.msra.mxu0 0.0
  %675 = vmatpush.msra.mxu0 0.0
  %676 = vmatpush.msra.mxu0 0.0
  %677 = vmatpush.msra.mxu0 0.0
  %678 = vmatpush.msra.mxu0 0.0
  %679 = vmatpush.msra.mxu0 0.0
  %680 = vmatpush.msra.mxu0 0.0
  %681 = vmatpush.msra.mxu0 0.0
  %682 = vmatpush.msra.mxu0 %v48
  %683 = vmatmul.f32.gmra.mxu0 %v665
  %v684 = vpop.f32.mrf.mxu0
  %v685 = vadd.f32 0.0, %v684
  %686 = vdwg.mxu0
  %v687 = vperm.slane %v662, 0
  %v688 = vmul.f32 %v555, %v687
  %v689 = vmul.f32 %v556, %v687
  %v690 = vmul.f32 %v557, %v687
  %v691 = vmul.f32 %v558, %v687
  %v692 = vperm.slane %v685, 0
  %v693 = vadd.f32 %v688, %v692
  %v694 = vadd.f32 %v689, %v692
  %v695 = vadd.f32 %v690, %v692
  %v696 = vadd.f32 %v691, %v692
  %v697 = vmax.f32 %v693, 0.0
  %v698 = vmax.f32 %v694, 0.0
  %v699 = vmax.f32 %v695, 0.0
  %v700 = vmax.f32 %v696, 0.0
  %701 = vst [vmem:[%s9] sm:$0xff] %v697
  %702 = vst [vmem:[%s9 + $0x8] sm:$0xff] %v698
  %703 = vst [vmem:[%s9 + $0x10] sm:$0xff] %v699
  %704 = vst [vmem:[%s9 + $0x18] sm:$0xff] %v700
  // Predicated region
  $region38: #{encoder_block_forward.1} parent=0 // pred_check
    _
  $region39: #{encoder_block_forward.1} parent=0 // pred_check_branch
    %706 = sbr.rel (0) target = $region41
  $region40: #{encoder_block_forward.1} parent=0 // pred_region
    _
  $region41: #{encoder_block_forward.1} parent=0 // pred_fallthru
    _
  // Predicated region
  $region42: #{encoder_block_forward.1} parent=0 // pred_check
    _
  $region43: #{encoder_block_forward.1} parent=0 // pred_check_branch
    %708 = sbr.rel (0) target = $region45
  $region44: #{encoder_block_forward.1} parent=0 // pred_region
    _
  $region45: #{encoder_block_forward.1} parent=0 // pred_fallthru
    _

</llo_original>
